<compile_context>
chip_gen: v7x
topology: tpu7x:2x2x1
jax: 0.10.0
libtpu: 0.0.40
codegen_flags: <defaults>
</compile_context>

<pallas_src>
import functools

import jax
import jax.numpy as jnp
from jax import lax
from jax.experimental import pallas as pl
from jax.experimental.pallas import tpu as pltpu


def _cpe_kernel(x_ref, xprev_ref, xnext_ref, w_ref, b_ref, o_ref, *, K, pad, halo):
    # x_ref:     (1, TL, TD)   current (batch, L-tile, D-tile) block
    # xprev_ref: (1, halo, TD) last `halo` rows of the previous L-tile (clamped)
    # xnext_ref: (1, halo, TD) first `halo` rows of the next L-tile (clamped)
    # w_ref:     (K, TD)       depthwise taps, tap-major (lane = channel)
    # b_ref:     (1, TD)       per-channel bias
    li = pl.program_id(1)
    n_l = pl.num_programs(1)
    has_prev = li > 0
    has_next = li < n_l - 1

    x = x_ref[0].astype(jnp.float32)             # (TL, TD)
    TL, TD = x.shape
    w = w_ref[...].astype(jnp.float32)           # (K, TD)  -- cast hoisted
    b = b_ref[...].astype(jnp.float32)           # (1, TD)

    row = lax.broadcasted_iota(jnp.int32, (TL, TD), 0)

    # Bias-initialized accumulator; per-tap sublane rolls + boundary masks
    # replace the padded-copy/concat of the naive version.
    acc = jnp.broadcast_to(b, (TL, TD))
    for k in range(K):                           # static unroll over taps
        d = k - pad                              # out[l] += w[k] * x_glob[l + d]
        if d == 0:
            shifted = x
        else:
            rolled = pltpu.roll(x, (-d) % TL, axis=0)   # rolled[l] = x[(l+d) % TL]
            valid = (row >= -d) if d < 0 else (row < TL - d)
            shifted = jnp.where(valid, rolled, 0.0)
        acc = acc + shifted * w[k]

    # Tile-seam corrections: the first / last `pad` output rows pull their
    # out-of-tile taps from the small halo blocks (zero at sequence edges).
    for k in range(K):
        d = k - pad
        if d < 0:
            for l0 in range(-d):                 # output rows 0 .. -d-1
                src = xprev_ref[0, halo + l0 + d, :].astype(jnp.float32)
                acc = acc + jnp.where((row == l0) & has_prev, src * w[k], 0.0)
        elif d > 0:
            for l0 in range(TL - d, TL):         # output rows TL-d .. TL-1
                src = xnext_ref[0, l0 + d - TL, :].astype(jnp.float32)
                acc = acc + jnp.where((row == l0) & has_next, src * w[k], 0.0)

    o_ref[0] = acc.astype(o_ref.dtype)


def _pick_tile(full, preferred, align):
    """Largest multiple of `align` that is <= preferred and divides `full`;
    falls back to the full extent (always a legal block shape)."""
    t = (min(preferred, full) // align) * align
    while t >= align:
        if full % t == 0:
            return t
        t -= align
    return full


def cpe_forward(x, weight, bias, *, tile_l=512, tile_d=512):
    """x: (B, L, D); weight: (D, 1, K) PyTorch Conv1d layout; bias: (D,)."""
    B, L, D = x.shape
    K = weight.shape[-1]
    if K % 2 != 1:
        raise ValueError("CPE kernel requires odd kernel_size: PyTorch "
                         "Conv1d(padding=K//2) only preserves length for odd K.")
    pad = K // 2
    if L < pad:
        raise ValueError("sequence length must be >= kernel_size // 2")

    # Tap-major weights (K, D) so tap k broadcasts over channel lanes; 2-D bias.
    w_kd = jnp.transpose(weight[:, 0, :], (1, 0))
    b_2d = bias.reshape(1, D)

    halo = max(8, ((pad + 7) // 8) * 8)          # sublane-aligned halo rows
    tl = _pick_tile(L, tile_l, halo)             # L tile (sublane axis)
    td = _pick_tile(D, tile_d, 128)              # lane-dense D tile
    halo_blk = halo if L >= halo else L
    n_l, n_d = L // tl, D // td
    r = max(tl // halo_blk, 1)                   # halo blocks per L tile
    n_halo = pl.cdiv(L, halo_blk)

    kernel = functools.partial(_cpe_kernel, K=K, pad=pad, halo=halo_blk)
    return pl.pallas_call(
        kernel,
        out_shape=jax.ShapeDtypeStruct((B, L, D), x.dtype),
        grid_spec=pltpu.PrefetchScalarGridSpec(
            num_scalar_prefetch=0,
            grid=(B, n_l, n_d),
            in_specs=[
                pl.BlockSpec((1, tl, td), lambda b, l, d: (b, l, d)),
                # last `halo_blk` rows of the previous L tile (clamped at l==0;
                # unused rows are masked off in-kernel)
                pl.BlockSpec((1, halo_blk, td),
                             lambda b, l, d: (b, jnp.maximum(l * r - 1, 0), d)),
                # first `halo_blk` rows of the next L tile (clamped at the end)
                pl.BlockSpec((1, halo_blk, td),
                             lambda b, l, d: (b, jnp.minimum((l + 1) * r, n_halo - 1), d)),
                pl.BlockSpec((K, td), lambda b, l, d: (0, d)),
                pl.BlockSpec((1, td), lambda b, l, d: (0, d)),
            ],
            out_specs=pl.BlockSpec((1, tl, td), lambda b, l, d: (b, l, d)),
        ),
        compiler_params=pltpu.CompilerParams(
            dimension_semantics=("parallel", "parallel", "parallel"),
            vmem_limit_bytes=32 * 1024 * 1024,
        ),
    )(x, x, x, w_kd, b_2d)


def _reference(x, weight, bias):
    """Pure-JAX reference of the PyTorch forward (NLC in / NLC out)."""
    B, L, D = x.shape
    K = weight.shape[-1]
    pad = K // 2
    xp = jnp.pad(x, ((0, 0), (pad, pad), (0, 0)))
    out = jnp.zeros((B, L, D), jnp.float32) + bias.astype(jnp.float32)
    for k in range(K):
        out = out + xp[:, k:k + L, :].astype(jnp.float32) * weight[:, 0, k].astype(jnp.float32)
    return out.astype(x.dtype)


if __name__ == "__main__":
    key = jax.random.PRNGKey(0)
    kx, kw, kb, kx2 = jax.random.split(key, 4)

    # Small test matching the module (seq=8, hidden=32, kernel_size=3).
    B, L, D, K = 2, 8, 32, 3
    x = jax.random.normal(kx, (B, L, D), dtype=jnp.float32)
    weight = jax.random.normal(kw, (D, 1, K), dtype=jnp.float32) * 0.1
    bias = jax.random.normal(kb, (D,), dtype=jnp.float32) * 0.01

    out = jax.block_until_ready(cpe_forward(x, weight, bias))
    ref = _reference(x, weight, bias)
    assert out.shape == (B, L, D)
    assert jnp.allclose(out, ref, atol=1e-5, rtol=1e-5)

    # Second (still small) check that exercises the tiled path:
    # L tiled with halo seams, lane-dense D tile of 128.
    B2, L2, D2 = 2, 64, 128
    kw2, kb2 = jax.random.split(kb)
    x2 = jax.random.normal(kx2, (B2, L2, D2), dtype=jnp.float32)
    w2 = jax.random.normal(kw2, (D2, 1, K), dtype=jnp.float32) * 0.1
    b2 = jax.random.normal(kb2, (D2,), dtype=jnp.float32) * 0.01
    out2 = jax.block_until_ready(cpe_forward(x2, w2, b2, tile_l=16, tile_d=128))
    ref2 = _reference(x2, w2, b2)
    assert jnp.allclose(out2, ref2, atol=1e-5, rtol=1e-5)

    print("KERNEL_OK")
</pallas_src>

<mosaic_0001>
module attributes {stable_mosaic.version = 11 : i64} {
  func.func @_cpe_kernel(%arg0: i32, %arg1: i32, %arg2: i32, %arg3: memref<1x8x32xf32, #tpu.memory_space<vmem>>, %arg4: memref<1x8x32xf32, #tpu.memory_space<vmem>>, %arg5: memref<1x8x32xf32, #tpu.memory_space<vmem>>, %arg6: memref<3x32xf32, #tpu.memory_space<vmem>>, %arg7: memref<1x32xf32, #tpu.memory_space<vmem>>, %arg8: memref<1x8x32xf32, #tpu.memory_space<vmem>>) attributes {dimension_semantics = [#tpu.dimension_semantics<parallel>, #tpu.dimension_semantics<parallel>, #tpu.dimension_semantics<parallel>], iteration_bounds = array<i64: 2, 1, 1>, scalar_prefetch = 0 : i64, scratch_operands = 0 : i64, tpu.core_type = #tpu.core_type<tc>, window_params = [{transform_indices = @transform_0, window_bounds = array<i64: 1, 8, 32>}, {transform_indices = @transform_1, window_bounds = array<i64: 1, 8, 32>}, {transform_indices = @transform_2, window_bounds = array<i64: 1, 8, 32>}, {transform_indices = @transform_3, window_bounds = array<i64: 3, 32>}, {transform_indices = @transform_4, window_bounds = array<i64: 1, 32>}, {transform_indices = @transform_5, window_bounds = array<i64: 1, 8, 32>}]} {
    %c0_i32 = arith.constant 0 : i32
    %0 = arith.cmpi sgt, %arg1, %c0_i32 : i32
    %c0_i32_0 = arith.constant 0 : i32
    %1 = arith.cmpi slt, %arg1, %c0_i32_0 : i32
    %c0 = arith.constant 0 : index
    %c0_1 = arith.constant 0 : index
    %c0_2 = arith.constant 0 : index
    %2 = vector.load %arg3[%c0, %c0_1, %c0_2] : memref<1x8x32xf32, #tpu.memory_space<vmem>>, vector<1x8x32xf32>
    %3 = vector.shape_cast %2 : vector<1x8x32xf32> to vector<8x32xf32>
    %c0_3 = arith.constant 0 : index
    %c0_4 = arith.constant 0 : index
    %4 = vector.load %arg6[%c0_3, %c0_4] : memref<3x32xf32, #tpu.memory_space<vmem>>, vector<3x32xf32>
    %c0_5 = arith.constant 0 : index
    %c0_6 = arith.constant 0 : index
    %5 = vector.load %arg7[%c0_5, %c0_6] : memref<1x32xf32, #tpu.memory_space<vmem>>, vector<1x32xf32>
    %6 = tpu.iota {dimensions = array<i32: 0>} : vector<8x32xi32>
    %7 = vector.shape_cast %5 : vector<1x32xf32> to vector<1x32xf32>
    %8 = vector.broadcast %7 : vector<1x32xf32> to vector<8x32xf32>
    %c1_i32 = arith.constant 1 : i32
    %9 = tpu.dynamic_rotate %3 by %c1_i32 dim 0 : vector<8x32xf32>, i32 -> vector<8x32xf32>
    %c1_i32_7 = arith.constant 1 : i32
    %10 = vector.broadcast %c1_i32_7 : i32 to vector<8x32xi32>
    %11 = arith.cmpi sge, %6, %10 : vector<8x32xi32>
    %cst = arith.constant 0.000000e+00 : f32
    %12 = vector.broadcast %cst : f32 to vector<8x32xf32>
    %13 = arith.select %11, %9, %12 : vector<8x32xi1>, vector<8x32xf32>
    %14 = vector.extract_strided_slice %4 {offsets = [0, 0], sizes = [1, 32], strides = [1, 1]} : vector<3x32xf32> to vector<1x32xf32>
    %15 = vector.shape_cast %14 : vector<1x32xf32> to vector<32xf32>
    %16 = vector.shape_cast %15 : vector<32xf32> to vector<1x32xf32>
    %17 = vector.broadcast %16 : vector<1x32xf32> to vector<8x32xf32>
    %18 = arith.mulf %13, %17 : vector<8x32xf32>
    %19 = arith.addf %8, %18 : vector<8x32xf32>
    %20 = vector.extract_strided_slice %4 {offsets = [1, 0], sizes = [1, 32], strides = [1, 1]} : vector<3x32xf32> to vector<1x32xf32>
    %21 = vector.shape_cast %20 : vector<1x32xf32> to vector<32xf32>
    %22 = vector.shape_cast %21 : vector<32xf32> to vector<1x32xf32>
    %23 = vector.broadcast %22 : vector<1x32xf32> to vector<8x32xf32>
    %24 = arith.mulf %3, %23 : vector<8x32xf32>
    %25 = arith.addf %19, %24 : vector<8x32xf32>
    %c7_i32 = arith.constant 7 : i32
    %26 = tpu.dynamic_rotate %3 by %c7_i32 dim 0 : vector<8x32xf32>, i32 -> vector<8x32xf32>
    %c7_i32_8 = arith.constant 7 : i32
    %27 = vector.broadcast %c7_i32_8 : i32 to vector<8x32xi32>
    %28 = arith.cmpi slt, %6, %27 : vector<8x32xi32>
    %cst_9 = arith.constant 0.000000e+00 : f32
    %29 = vector.broadcast %cst_9 : f32 to vector<8x32xf32>
    %30 = arith.select %28, %26, %29 : vector<8x32xi1>, vector<8x32xf32>
    %31 = vector.extract_strided_slice %4 {offsets = [2, 0], sizes = [1, 32], strides = [1, 1]} : vector<3x32xf32> to vector<1x32xf32>
    %32 = vector.shape_cast %31 : vector<1x32xf32> to vector<32xf32>
    %33 = vector.shape_cast %32 : vector<32xf32> to vector<1x32xf32>
    %34 = vector.broadcast %33 : vector<1x32xf32> to vector<8x32xf32>
    %35 = arith.mulf %30, %34 : vector<8x32xf32>
    %36 = arith.addf %25, %35 : vector<8x32xf32>
    %c0_10 = arith.constant 0 : index
    %c7 = arith.constant 7 : index
    %c0_11 = arith.constant 0 : index
    %37 = vector.load %arg4[%c0_10, %c7, %c0_11] : memref<1x8x32xf32, #tpu.memory_space<vmem>>, vector<1x1x32xf32>
    %38 = vector.shape_cast %37 : vector<1x1x32xf32> to vector<32xf32>
    %c0_i32_12 = arith.constant 0 : i32
    %39 = vector.broadcast %c0_i32_12 : i32 to vector<8x32xi32>
    %40 = arith.cmpi eq, %6, %39 : vector<8x32xi32>
    %41 = vector.broadcast %0 : i1 to vector<8x32xi1>
    %42 = arith.andi %40, %41 : vector<8x32xi1>
    %43 = vector.extract_strided_slice %4 {offsets = [0, 0], sizes = [1, 32], strides = [1, 1]} : vector<3x32xf32> to vector<1x32xf32>
    %44 = vector.shape_cast %43 : vector<1x32xf32> to vector<32xf32>
    %45 = arith.mulf %38, %44 : vector<32xf32>
    %cst_13 = arith.constant 0.000000e+00 : f32
    %46 = vector.shape_cast %45 : vector<32xf32> to vector<1x32xf32>
    %47 = vector.broadcast %46 : vector<1x32xf32> to vector<8x32xf32>
    %48 = vector.broadcast %cst_13 : f32 to vector<8x32xf32>
    %49 = arith.select %42, %47, %48 : vector<8x32xi1>, vector<8x32xf32>
    %50 = arith.addf %36, %49 : vector<8x32xf32>
    %c0_14 = arith.constant 0 : index
    %c0_15 = arith.constant 0 : index
    %c0_16 = arith.constant 0 : index
    %51 = vector.load %arg5[%c0_14, %c0_15, %c0_16] : memref<1x8x32xf32, #tpu.memory_space<vmem>>, vector<1x1x32xf32>
    %52 = vector.shape_cast %51 : vector<1x1x32xf32> to vector<32xf32>
    %c7_i32_17 = arith.constant 7 : i32
    %53 = vector.broadcast %c7_i32_17 : i32 to vector<8x32xi32>
    %54 = arith.cmpi eq, %6, %53 : vector<8x32xi32>
    %55 = vector.broadcast %1 : i1 to vector<8x32xi1>
    %56 = arith.andi %54, %55 : vector<8x32xi1>
    %57 = vector.extract_strided_slice %4 {offsets = [2, 0], sizes = [1, 32], strides = [1, 1]} : vector<3x32xf32> to vector<1x32xf32>
    %58 = vector.shape_cast %57 : vector<1x32xf32> to vector<32xf32>
    %59 = arith.mulf %52, %58 : vector<32xf32>
    %cst_18 = arith.constant 0.000000e+00 : f32
    %60 = vector.shape_cast %59 : vector<32xf32> to vector<1x32xf32>
    %61 = vector.broadcast %60 : vector<1x32xf32> to vector<8x32xf32>
    %62 = vector.broadcast %cst_18 : f32 to vector<8x32xf32>
    %63 = arith.select %56, %61, %62 : vector<8x32xi1>, vector<8x32xf32>
    %64 = arith.addf %50, %63 : vector<8x32xf32>
    %c0_19 = arith.constant 0 : index
    %c0_20 = arith.constant 0 : index
    %c0_21 = arith.constant 0 : index
    %65 = vector.load %arg8[%c0_19, %c0_20, %c0_21] : memref<1x8x32xf32, #tpu.memory_space<vmem>>, vector<1x8x32xf32>
    %66 = vector.shape_cast %65 : vector<1x8x32xf32> to vector<8x32xf32>
    %67 = vector.shape_cast %64 : vector<8x32xf32> to vector<1x8x32xf32>
    tpu.vector_store %arg8[%c0_19, %c0_20, %c0_21], %67 {strides = array<i32>} : memref<1x8x32xf32, #tpu.memory_space<vmem>>, vector<1x8x32xf32>,
    return
  }
  func.func @transform_0(%arg0: i32, %arg1: i32, %arg2: i32) -> (i32, i32, i32) {
    %c0_i32 = arith.constant 0 : i32
    return %arg0, %arg1, %arg2 : i32, i32, i32
  }
  func.func @transform_1(%arg0: i32, %arg1: i32, %arg2: i32) -> (i32, i32, i32) {
    %c1_i32 = arith.constant 1 : i32
    %0 = arith.muli %arg1, %c1_i32 : i32
    %c1_i32_0 = arith.constant 1 : i32
    %1 = arith.subi %0, %c1_i32_0 : i32
    %c0_i32 = arith.constant 0 : i32
    %2 = arith.maxsi %1, %c0_i32 : i32
    %c0_i32_1 = arith.constant 0 : i32
    return %arg0, %2, %arg2 : i32, i32, i32
  }
  func.func @transform_2(%arg0: i32, %arg1: i32, %arg2: i32) -> (i32, i32, i32) {
    %c1_i32 = arith.constant 1 : i32
    %0 = arith.addi %arg1, %c1_i32 : i32
    %c1_i32_0 = arith.constant 1 : i32
    %1 = arith.muli %0, %c1_i32_0 : i32
    %c0_i32 = arith.constant 0 : i32
    %2 = arith.minsi %1, %c0_i32 : i32
    %c0_i32_1 = arith.constant 0 : i32
    return %arg0, %2, %arg2 : i32, i32, i32
  }
  func.func @transform_3(%arg0: i32, %arg1: i32, %arg2: i32) -> (i32, i32) {
    %c0_i32 = arith.constant 0 : i32
    %c0_i32_0 = arith.constant 0 : i32
    return %c0_i32, %arg2 : i32, i32
  }
  func.func @transform_4(%arg0: i32, %arg1: i32, %arg2: i32) -> (i32, i32) {
    %c0_i32 = arith.constant 0 : i32
    %c0_i32_0 = arith.constant 0 : i32
    return %c0_i32, %arg2 : i32, i32
  }
  func.func @transform_5(%arg0: i32, %arg1: i32, %arg2: i32) -> (i32, i32, i32) {
    %c0_i32 = arith.constant 0 : i32
    return %arg0, %arg1, %arg2 : i32, i32, i32
  }
}

</mosaic_0001>

<llo_original>
// kernel: tpu_custom_call.1
$region0: #{tpu_custom_call.1}
  #allocation0 [shape = 'u32[]', space=smem, size = 0x4, offset = 0x4, fixed_abs, tag = 'smem constant byte address 0x4 - core index']
  #allocation1 [shape = 'u32[144,128]{1,0:T(1,128)}', space=vmem, size = 0x12000, scoped, tag = 'internal scratch']
  %s0 = inlined_call_operand.hbm [shape: f32[2,8,32], index: 0, kind: input, shape index: {}]
  %s1 = inlined_call_operand.hbm [shape: f32[2,8,32], index: 1, kind: input, shape index: {}]
  %s2 = inlined_call_operand.hbm [shape: f32[2,8,32], index: 2, kind: input, shape index: {}]
  %s3 = inlined_call_operand.vmem [shape: f32[3,32], index: 3, kind: input, shape index: {}]
  %s4 = inlined_call_operand.vmem [shape: f32[1,32], index: 4, kind: input, shape index: {}]
  %s5 = inlined_call_operand.hbm [shape: f32[2,8,32], index: 5, kind: output, shape index: {}]
  %s6 = sld [smem:[#allocation0]]
  $region65: #{tpu_custom_call.1} parent=0
    _
  %s8 = ssub.s32 1, %s6
  %s9 = scalar_select 0, %s8, %s6
  $region1: #{tpu_custom_call.1} parent=0
    #allocation2 [shape = 'u8[8192]{0}', space=vmem, size = 0x2000, scoped, tag = 'input window, operand 0']
    #allocation3 [shape = 's32[2]{0}', space=sflag, size = 0x8, scoped, tag = 'scoped memory for tpu_custom_call.1']
    #allocation4 [shape = 's32[2]{0}', space=sflag, size = 0x8, scoped, tag = 'scoped memory for tpu_custom_call.1']
    #allocation5 [shape = 'u8[8192]{0}', space=vmem, size = 0x2000, scoped, tag = 'input window, operand 1']
    #allocation6 [shape = 's32[2]{0}', space=sflag, size = 0x8, scoped, tag = 'scoped memory for tpu_custom_call.1']
    #allocation7 [shape = 'u8[8192]{0}', space=vmem, size = 0x2000, scoped, tag = 'input window, operand 2']
    #allocation8 [shape = 'u8[8192]{0}', space=vmem, size = 0x2000, scoped, tag = 'output window, operand 0']
    %10 = vsyncpa [#allocation3], 0
    %s11 = scalar_lea.sflag [#allocation3], 1
    %12 = vsyncpa %s11, 0
    %13 = vsyncpa [#allocation6], 0
    %s14 = scalar_lea.sflag [#allocation6], 1
    %15 = vsyncpa %s14, 0
    %16 = vsyncpa [#allocation4], 0
    %s17 = scalar_lea.sflag [#allocation4], 1
    %18 = vsyncpa %s17, 0
    loop: start=0, step=1, limit=4
    $region2: #{tpu_custom_call.1} parent=1 // loop_pre_header
      _
    $region3: #{tpu_custom_call.1} parent=1 // loop_header
      %s20 = sphi 0, %s24
      %p21 = scmp.ge.s32.totalorder %s20, 4
      %s27 = sphi 0, %s46
      %s28 = sphi 0, %s42
      %s29 = sphi 0, %s38
      %s30 = sphi 0, %s27
      %s31 = sphi 0, %s28
      %s32 = sphi 0, %s29
      %s33 = sphi 0, %s30
      %s34 = sphi 0, %s31
      %s35 = sphi 0, %s32
      %s53 = sphi 0, %s55
      %s56 = sphi 0, %s53
      %s57 = sphi 0, %s56
      %s73 = sphi 0, %s57
      %s89 = sphi 0, %s91
      %s92 = sphi 0, %s89
      %s93 = sphi 0, %s92
      %s109 = sphi 0, %s93
      %s125 = sphi 0, %s127
      %s128 = sphi 0, %s125
      %s129 = sphi 0, %s128
      %s145 = sphi 0, %s129
      %s151 = sphi 0, %s153
      %s154 = sphi 0, %s151
      %s155 = sphi 0, %s154
      %s171 = sphi 0, %s155
      %s177 = sphi 0, %s179
      %s180 = sphi 0, %s177
      %s181 = sphi 0, %s180
      %s197 = sphi 0, %s181
      %s207 = sphi 0, %s209
      %s210 = sphi 0, %s207
      %s211 = sphi 0, %s210
      %s227 = sphi 0, %s211
    $region4: #{tpu_custom_call.1} parent=1 // loop_header_branch
      %23 = sbr.rel (%p21) target = $region8
    $region5: #{tpu_custom_call.1} parent=1 // loop_body
      %s25 = ssub.s32 %s20, 1
      %s26 = ssub.s32 %s20, 2
      %s36 = sadd.s32 1, %s29
      %p37 = scmp.ge.s32.totalorder %s36, 1
      %s38 = scalar_select %p37, 0, %s36
      %s39 = sadd.s32 1, %s28
      %s40 = scalar_select %p37, %s39, %s28
      %p41 = scmp.ge.s32.totalorder %s40, 1
      %s42 = scalar_select %p41, 0, %s40
      %s43 = sadd.s32 1, %s27
      %s44 = scalar_select %p41, %s43, %s27
      %p45 = scmp.ge.s32.totalorder %s44, 2
      %s46 = scalar_select %p45, 0, %s44
      %s47 = ssub.s32 %s27, %s46
      %s48 = ssub.s32 %s28, %s42
      %s49 = sor.u32 %s47, %s48
      %s50 = ssub.s32 %s29, %s38
      %s51 = sor.u32 %s49, %s50
      %p52 = scmp.eq.s32.totalorder %s51, 0
      %s54 = sadd.s32 %s53, 1
      %s55 = scalar_select %p52, %s53, %s54
      %p58 = pneg %p52
      %p59 = scmp.eq.s32.totalorder %s20, 1
      %p60 = por %p58, %p59
      %p61 = scmp.ne.s32.totalorder %s53, %s56
      %p62 = scmp.eq.s32.totalorder %s20, 0
      %p63 = por %p61, %p62
      %p64 = scmp.ne.s32.totalorder %s53, %s56
      %p65 = scmp.eq.s32.totalorder %s25, 1
      %p66 = por %p64, %p65
      %p67 = scmp.ne.s32.totalorder %s56, %s57
      %p68 = scmp.eq.s32.totalorder %s25, 0
      %p69 = por %p67, %p68
      %p70 = scmp.ne.s32.totalorder %s56, %s57
      %p71 = scmp.eq.s32.totalorder %s26, 1
      %p72 = por %p70, %p71
      %p74 = scmp.ne.s32.totalorder %s57, %s73
      %p75 = scmp.eq.s32.totalorder %s26, 0
      %p76 = por %p74, %p75
      %s77 = ssub.s32 %s28, 1
      %p78 = scmp.gt.s32.totalorder %s77, 0
      %s79 = scalar_select %p78, %s77, 0
      %s80 = ssub.s32 %s42, 1
      %p81 = scmp.gt.s32.totalorder %s80, 0
      %s82 = scalar_select %p81, %s80, 0
      %s83 = ssub.s32 %s27, %s46
      %s84 = ssub.s32 %s79, %s82
      %s85 = sor.u32 %s83, %s84
      %s86 = ssub.s32 %s29, %s38
      %s87 = sor.u32 %s85, %s86
      %p88 = scmp.eq.s32.totalorder %s87, 0
      %s90 = sadd.s32 %s89, 1
      %s91 = scalar_select %p88, %s89, %s90
      %p94 = pneg %p88
      %p95 = scmp.eq.s32.totalorder %s20, 1
      %p96 = por %p94, %p95
      %p97 = scmp.ne.s32.totalorder %s89, %s92
      %p98 = scmp.eq.s32.totalorder %s20, 0
      %p99 = por %p97, %p98
      %p100 = scmp.ne.s32.totalorder %s89, %s92
      %p101 = scmp.eq.s32.totalorder %s25, 1
      %p102 = por %p100, %p101
      %p103 = scmp.ne.s32.totalorder %s92, %s93
      %p104 = scmp.eq.s32.totalorder %s25, 0
      %p105 = por %p103, %p104
      %p106 = scmp.ne.s32.totalorder %s92, %s93
      %p107 = scmp.eq.s32.totalorder %s26, 1
      %p108 = por %p106, %p107
      %p110 = scmp.ne.s32.totalorder %s93, %s109
      %p111 = scmp.eq.s32.totalorder %s26, 0
      %p112 = por %p110, %p111
      %s113 = sadd.s32 %s28, 1
      %p114 = scmp.lt.s32.totalorder %s113, 0
      %s115 = scalar_select %p114, %s113, 0
      %s116 = sadd.s32 %s42, 1
      %p117 = scmp.lt.s32.totalorder %s116, 0
      %s118 = scalar_select %p117, %s116, 0
      %s119 = ssub.s32 %s27, %s46
      %s120 = ssub.s32 %s115, %s118
      %s121 = sor.u32 %s119, %s120
      %s122 = ssub.s32 %s29, %s38
      %s123 = sor.u32 %s121, %s122
      %p124 = scmp.eq.s32.totalorder %s123, 0
      %s126 = sadd.s32 %s125, 1
      %s127 = scalar_select %p124, %s125, %s126
      %p130 = pneg %p124
      %p131 = scmp.eq.s32.totalorder %s20, 1
      %p132 = por %p130, %p131
      %p133 = scmp.ne.s32.totalorder %s125, %s128
      %p134 = scmp.eq.s32.totalorder %s20, 0
      %p135 = por %p133, %p134
      %p136 = scmp.ne.s32.totalorder %s125, %s128
      %p137 = scmp.eq.s32.totalorder %s25, 1
      %p138 = por %p136, %p137
      %p139 = scmp.ne.s32.totalorder %s128, %s129
      %p140 = scmp.eq.s32.totalorder %s25, 0
      %p141 = por %p139, %p140
      %p142 = scmp.ne.s32.totalorder %s128, %s129
      %p143 = scmp.eq.s32.totalorder %s26, 1
      %p144 = por %p142, %p143
      %p146 = scmp.ne.s32.totalorder %s129, %s145
      %p147 = scmp.eq.s32.totalorder %s26, 0
      %p148 = por %p146, %p147
      %s149 = ssub.s32 %s29, %s38
      %p150 = scmp.eq.s32.totalorder %s149, 0
      %s152 = sadd.s32 %s151, 1
      %s153 = scalar_select %p150, %s151, %s152
      %p156 = pneg %p150
      %p157 = scmp.eq.s32.totalorder %s20, 1
      %p158 = por %p156, %p157
      %p159 = scmp.ne.s32.totalorder %s151, %s154
      %p160 = scmp.eq.s32.totalorder %s20, 0
      %p161 = por %p159, %p160
      %p162 = scmp.ne.s32.totalorder %s151, %s154
      %p163 = scmp.eq.s32.totalorder %s25, 1
      %p164 = por %p162, %p163
      %p165 = scmp.ne.s32.totalorder %s154, %s155
      %p166 = scmp.eq.s32.totalorder %s25, 0
      %p167 = por %p165, %p166
      %p168 = scmp.ne.s32.totalorder %s154, %s155
      %p169 = scmp.eq.s32.totalorder %s26, 1
      %p170 = por %p168, %p169
      %p172 = scmp.ne.s32.totalorder %s155, %s171
      %p173 = scmp.eq.s32.totalorder %s26, 0
      %p174 = por %p172, %p173
      %s175 = ssub.s32 %s29, %s38
      %p176 = scmp.eq.s32.totalorder %s175, 0
      %s178 = sadd.s32 %s177, 1
      %s179 = scalar_select %p176, %s177, %s178
      %p182 = pneg %p176
      %p183 = scmp.eq.s32.totalorder %s20, 1
      %p184 = por %p182, %p183
      %p185 = scmp.ne.s32.totalorder %s177, %s180
      %p186 = scmp.eq.s32.totalorder %s20, 0
      %p187 = por %p185, %p186
      %p188 = scmp.ne.s32.totalorder %s177, %s180
      %p189 = scmp.eq.s32.totalorder %s25, 1
      %p190 = por %p188, %p189
      %p191 = scmp.ne.s32.totalorder %s180, %s181
      %p192 = scmp.eq.s32.totalorder %s25, 0
      %p193 = por %p191, %p192
      %p194 = scmp.ne.s32.totalorder %s180, %s181
      %p195 = scmp.eq.s32.totalorder %s26, 1
      %p196 = por %p194, %p195
      %p198 = scmp.ne.s32.totalorder %s181, %s197
      %p199 = scmp.eq.s32.totalorder %s26, 0
      %p200 = por %p198, %p199
      %s201 = ssub.s32 %s27, %s46
      %s202 = ssub.s32 %s28, %s42
      %s203 = sor.u32 %s201, %s202
      %s204 = ssub.s32 %s29, %s38
      %s205 = sor.u32 %s203, %s204
      %p206 = scmp.eq.s32.totalorder %s205, 0
      %s208 = sadd.s32 %s207, 1
      %s209 = scalar_select %p206, %s207, %s208
      %p212 = pneg %p206
      %p213 = scmp.eq.s32.totalorder %s20, 1
      %p214 = por %p212, %p213
      %p215 = scmp.ne.s32.totalorder %s207, %s210
      %p216 = scmp.eq.s32.totalorder %s20, 0
      %p217 = por %p215, %p216
      %p218 = scmp.ne.s32.totalorder %s207, %s210
      %p219 = scmp.eq.s32.totalorder %s25, 1
      %p220 = por %p218, %p219
      %p221 = scmp.ne.s32.totalorder %s210, %s211
      %p222 = scmp.eq.s32.totalorder %s25, 0
      %p223 = por %p221, %p222
      %p224 = scmp.ne.s32.totalorder %s210, %s211
      %p225 = scmp.eq.s32.totalorder %s26, 1
      %p226 = por %p224, %p225
      %p228 = scmp.ne.s32.totalorder %s211, %s227
      %p229 = scmp.eq.s32.totalorder %s26, 0
      %p230 = por %p228, %p229
      %p231 = scmp.le.s32.totalorder 1, %s20
      %p232 = scmp.lt.s32.totalorder %s20, 3
      %p233 = pnand %p231, %p232
      %p234 = pneg %p233
      // Predicated region
      $region9: #{tpu_custom_call.1} parent=5 // pred_check
        _
      $region10: #{tpu_custom_call.1} parent=5 // pred_check_branch
        %236 = sbr.rel (%p233) target = $region12
      $region11: #{tpu_custom_call.1} parent=5 // pred_region
        %s237 = ssub.s32 %s20, 1
        // Predicated region
        $region13: #{tpu_custom_call.1} parent=11 // pred_check
          %p238 = pneg %p167
        $region14: #{tpu_custom_call.1} parent=11 // pred_check_branch
          %240 = sbr.rel (%p238) target = $region16
        $region15: #{tpu_custom_call.1} parent=11 // pred_region
          %p241 = scmp.lt.s32.totalorder %s32, 0
          %s242 = scalar_select %p241, %s32, 0
          %s243 = smul.addr %s242, 4
          %s244 = scalar_lea.vmem %s3, %s243
        $region16: #{tpu_custom_call.1} parent=11 // pred_fallthru
          _
        // Predicated region
        $region17: #{tpu_custom_call.1} parent=11 // pred_check
          %p245 = pneg %p193
        $region18: #{tpu_custom_call.1} parent=11 // pred_check_branch
          %247 = sbr.rel (%p245) target = $region20
        $region19: #{tpu_custom_call.1} parent=11 // pred_region
          %p248 = scmp.lt.s32.totalorder %s32, 0
          %s249 = scalar_select %p248, %s32, 0
          %s250 = scalar_lea.vmem %s4, %s249
        $region20: #{tpu_custom_call.1} parent=11 // pred_fallthru
          _
      $region12: #{tpu_custom_call.1} parent=5 // pred_fallthru
        _
      %p251 = scmp.lt.s32.totalorder %s20, 2
      // Predicated region
      $region21: #{tpu_custom_call.1} parent=5 // pred_check
        %p252 = pneg %p251
      $region22: #{tpu_custom_call.1} parent=5 // pred_check_branch
        %254 = sbr.rel (%p252) target = $region24
      $region23: #{tpu_custom_call.1} parent=5 // pred_region
        // Predicated region
        $region25: #{tpu_custom_call.1} parent=23 // pred_check
          %p255 = pneg %p63
        $region26: #{tpu_custom_call.1} parent=23 // pred_check_branch
          %257 = sbr.rel (%p255) target = $region28
        $region27: #{tpu_custom_call.1} parent=23 // pred_region
          %s258 = sand.u32 %s53, 1
          %s259 = scalar_lea.sflag [#allocation3], %s258
          %s260 = sand.u32 %s53, 1
          %s261 = smul.addr %s260, 8
          %s262 = scalar_lea.vmem [#allocation2], %s261
          %s264 = ssub.s32 128, 128
          %265 = vsyncadd %s259, %s264
          %s266 = sadd.s32 %s29, %s28
          %s267 = sadd.s32 %s266, %s27
          %s268 = smul.addr %s267, 128
          %s269 = scalar_lea.hbm %s0, %s268
          %s271 = sshll.u32 %s262, 4
          %s272 = int_to_ptr.vmem [resolvable:$true] %s271
          %274 = dma.hbm_to_vmem [thread:$0]  %s269, 128, %s272, %s259
        $region28: #{tpu_custom_call.1} parent=23 // pred_fallthru
          _
        // Predicated region
        $region29: #{tpu_custom_call.1} parent=23 // pred_check
          %p275 = pneg %p99
        $region30: #{tpu_custom_call.1} parent=23 // pred_check_branch
          %277 = sbr.rel (%p275) target = $region32
        $region31: #{tpu_custom_call.1} parent=23 // pred_region
          %s278 = sand.u32 %s20, 1
          %s279 = scalar_lea.sflag [#allocation6], %s278
          %s280 = sand.u32 %s89, 1
          %s281 = smul.addr %s280, 8
          %s282 = scalar_lea.vmem [#allocation5], %s281
          %s283 = ssub.s32 %s28, 1
          %p284 = scmp.gt.s32.totalorder %s283, 0
          %s285 = scalar_select %p284, %s283, 0
          %s287 = ssub.s32 128, 128
          %288 = vsyncadd %s279, %s287
          %s289 = sadd.s32 %s29, %s285
          %s290 = sadd.s32 %s289, %s27
          %s291 = smul.addr %s290, 128
          %s292 = scalar_lea.hbm %s1, %s291
          %s294 = sshll.u32 %s282, 4
          %s295 = int_to_ptr.vmem [resolvable:$true] %s294
          %297 = dma.hbm_to_vmem [thread:$0]  %s292, 128, %s295, %s279
        $region32: #{tpu_custom_call.1} parent=23 // pred_fallthru
          _
        // Predicated region
        $region33: #{tpu_custom_call.1} parent=23 // pred_check
          %p298 = pneg %p135
        $region34: #{tpu_custom_call.1} parent=23 // pred_check_branch
          %300 = sbr.rel (%p298) target = $region36
        $region35: #{tpu_custom_call.1} parent=23 // pred_region
          %s301 = sand.u32 %s20, 1
          %s302 = scalar_lea.sflag [#allocation6], %s301
          %s303 = sand.u32 %s125, 1
          %s304 = smul.addr %s303, 8
          %s305 = scalar_lea.vmem [#allocation7], %s304
          %s306 = sadd.s32 %s28, 1
          %p307 = scmp.lt.s32.totalorder %s306, 0
          %s308 = scalar_select %p307, %s306, 0
          %s310 = ssub.s32 128, 128
          %311 = vsyncadd %s302, %s310
          %s312 = sadd.s32 %s29, %s308
          %s313 = sadd.s32 %s312, %s27
          %s314 = smul.addr %s313, 128
          %s315 = scalar_lea.hbm %s2, %s314
          %s317 = sshll.u32 %s305, 4
          %s318 = int_to_ptr.vmem [resolvable:$true] %s317
          %320 = dma.hbm_to_vmem [thread:$0]  %s315, 128, %s318, %s302
        $region36: #{tpu_custom_call.1} parent=23 // pred_fallthru
          _
      $region24: #{tpu_custom_call.1} parent=5 // pred_fallthru
        _
      %p321 = scmp.le.s32.totalorder 1, %s20
      %p322 = scmp.lt.s32.totalorder %s20, 3
      %p323 = pnand %p321, %p322
      %p324 = pneg %p323
      // Predicated region
      $region37: #{tpu_custom_call.1} parent=5 // pred_check
        _
      $region38: #{tpu_custom_call.1} parent=5 // pred_check_branch
        %326 = sbr.rel (%p323) target = $region40
      $region39: #{tpu_custom_call.1} parent=5 // pred_region
        %s327 = ssub.s32 %s20, 1
        %s328 = sand.u32 %s56, 1
        %s329 = scalar_lea.sflag [#allocation3], %s328
        %s330 = sand.u32 %s56, 1
        %s331 = smul.addr %s330, 8
        %s332 = scalar_lea.vmem [#allocation2], %s331
        // Predicated region
        $region41: #{tpu_custom_call.1} parent=39 // pred_check
          %p333 = pneg %p69
        $region42: #{tpu_custom_call.1} parent=39 // pred_check_branch
          %335 = sbr.rel (%p333) target = $region44
        $region43: #{tpu_custom_call.1} parent=39 // pred_region
          %336 = dma.done %s329, 128
        $region44: #{tpu_custom_call.1} parent=39 // pred_fallthru
          _
        %s337 = sand.u32 %s25, 1
        %s338 = scalar_lea.sflag [#allocation6], %s337
        %s339 = sand.u32 %s92, 1
        %s340 = smul.addr %s339, 8
        %s341 = scalar_lea.vmem [#allocation5], %s340
        // Predicated region
        $region45: #{tpu_custom_call.1} parent=39 // pred_check
          %p342 = pneg %p105
        $region46: #{tpu_custom_call.1} parent=39 // pred_check_branch
          %344 = sbr.rel (%p342) target = $region48
        $region47: #{tpu_custom_call.1} parent=39 // pred_region
          %345 = dma.done %s338, 128
        $region48: #{tpu_custom_call.1} parent=39 // pred_fallthru
          _
        %s346 = sand.u32 %s25, 1
        %s347 = scalar_lea.sflag [#allocation6], %s346
        %s348 = sand.u32 %s128, 1
        %s349 = smul.addr %s348, 8
        %s350 = scalar_lea.vmem [#allocation7], %s349
        // Predicated region
        $region49: #{tpu_custom_call.1} parent=39 // pred_check
          %p351 = pneg %p141
        $region50: #{tpu_custom_call.1} parent=39 // pred_check_branch
          %353 = sbr.rel (%p351) target = $region52
        $region51: #{tpu_custom_call.1} parent=39 // pred_region
          %354 = dma.done %s347, 128
        $region52: #{tpu_custom_call.1} parent=39 // pred_fallthru
          _
        %s355 = sand.u32 %s56, 1
        %s356 = scalar_lea.sflag [#allocation3], %s355
        %s357 = sand.u32 %s56, 1
        %s358 = smul.addr %s357, 8
        %s359 = scalar_lea.vmem [#allocation2], %s358
        %p360 = pneg %p69
        %p361 = pneg %p66
        %s362 = sand.u32 %s25, 1
        %s363 = scalar_lea.sflag [#allocation6], %s362
        %s364 = sand.u32 %s92, 1
        %s365 = smul.addr %s364, 8
        %s366 = scalar_lea.vmem [#allocation5], %s365
        %p367 = pneg %p105
        %p368 = pneg %p102
        %s369 = sand.u32 %s25, 1
        %s370 = scalar_lea.sflag [#allocation6], %s369
        %s371 = sand.u32 %s128, 1
        %s372 = smul.addr %s371, 8
        %s373 = scalar_lea.vmem [#allocation7], %s372
        %p374 = pneg %p141
        %p375 = pneg %p138
        %p376 = scmp.lt.s32.totalorder %s32, 0
        %s377 = scalar_select %p376, %s32, 0
        %s378 = smul.addr %s377, 4
        %s379 = scalar_lea.vmem %s3, %s378
        %p380 = pneg %p167
        %p381 = pneg %p164
        %p382 = scmp.lt.s32.totalorder %s32, 0
        %s383 = scalar_select %p382, %s32, 0
        %s384 = scalar_lea.vmem %s4, %s383
        %p385 = pneg %p193
        %p386 = pneg %p190
        %p387 = pneg %p223
        %p388 = pneg %p220
        %s389 = sand.u32 %s210, 1
        %s390 = scalar_lea.sflag [#allocation4], %s389
        %s391 = sand.u32 %s210, 1
        %s392 = smul.addr %s391, 8
        %s393 = scalar_lea.vmem [#allocation8], %s392
        %s394 = ssub.s32 %s31, 1
        %p395 = scmp.gt.s32.totalorder %s394, 0
        %s396 = scalar_select %p395, %s394, 0
        %s397 = sadd.s32 %s31, 1
        %p398 = scmp.lt.s32.totalorder %s397, 0
        %s399 = scalar_select %p398, %s397, 0
        %p400 = scmp.lt.s32.totalorder %s32, 0
        %s401 = scalar_select %p400, %s32, 0
        %s402 = smul.addr %s401, 4
        %s403 = scalar_lea.vmem %s3, %s402
        %p404 = scmp.lt.s32.totalorder %s32, 0
        %s405 = scalar_select %p404, %s32, 0
        %s406 = scalar_lea.vmem %s4, %s405
        %p407 = scmp.gt.s32.totalorder %s31, 0
        %p408 = scmp.lt.s32.totalorder %s31, 0
        %v409 = vld [vmem:[%s332] sm:$0xff]
        %v410 = vld [vmem:[%s403] sm:$0x7]
        %v411 = vld [vmem:[%s406] sm:$0x1]
        %v412 = vlaneseq
        %v413 = vshrl.u32 %v412, 7
        %v415 = vlaneseq
        %v416 = vshrl.u32 %v415, 7
        %v417 = vsub.s32 0, %v416
        %v418 = vrot.slane %v411, %v417
        %v420 = vrot.slane %v409, 7
        %vm421 = vcmp.ge.s32.totalorder %v413, 1
        %v422 = vsel %vm421, %v420, 0.0
        %v423 = vlaneseq
        %v424 = vshrl.u32 %v423, 7
        %v425 = vsub.s32 0, %v424
        %v426 = vrot.slane %v410, %v425
        %v427 = vmul.f32 %v422, %v426
        %v428 = vadd.f32 %v418, %v427
        %v429 = vlaneseq
        %v430 = vshrl.u32 %v429, 7
        %v431 = vsub.s32 1, %v430
        %v432 = vrot.slane %v410, %v431
        %v433 = vmul.f32 %v409, %v432
        %v434 = vadd.f32 %v428, %v433
        %v435 = vrot.slane %v409, 1
        %vm436 = vcmp.lt.s32.totalorder %v413, 7
        %v437 = vsel %vm436, %v435, 0.0
        %v438 = vlaneseq
        %v439 = vshrl.u32 %v438, 7
        %v440 = vsub.s32 2, %v439
        %v441 = vrot.slane %v410, %v440
        %v442 = vmul.f32 %v437, %v441
        %v443 = vadd.f32 %v434, %v442
        %v444 = vld [vmem:[%s341 + $0x7] sm:$0x1]
        %vm445 = vcmp.eq.s32.totalorder %v413, 0
        %s446 = scalar_select %p407, 1, 0
        %v447 = vstv %s446
        %vm448 = vcmp.eq.s32.totalorder %v447, 1
        %vm449 = vmand %vm445, %vm448
        %v450 = vmul.f32 %v444, %v410
        %v451 = vlaneseq
        %v452 = vshrl.u32 %v451, 7
        %v453 = vsub.s32 0, %v452
        %v454 = vrot.slane %v450, %v453
        %v455 = vsel %vm449, %v454, 0.0
        %v456 = vadd.f32 %v443, %v455
        %v457 = vld [vmem:[%s350] sm:$0x1]
        %vm458 = vcmp.eq.s32.totalorder %v413, 7
        %s459 = scalar_select %p408, 1, 0
        %v460 = vstv %s459
        %vm461 = vcmp.eq.s32.totalorder %v460, 1
        %vm462 = vmand %vm458, %vm461
        %v464 = vrot.slane %v410, 2
        %v466 = vmul.f32 %v457, %v464
        %v467 = vlaneseq
        %v468 = vshrl.u32 %v467, 7
        %v469 = vsub.s32 0, %v468
        %v470 = vrot.slane %v466, %v469
        %v471 = vsel %vm462, %v470, 0.0
        %v472 = vadd.f32 %v456, %v471
        %vm473 = vcmask 261120
        %474 = vst.msk [vmem:[%s393] sm:$0xff] %vm473, %v472
        %s475 = sand.u32 %s210, 1
        %s476 = scalar_lea.sflag [#allocation4], %s475
        %s477 = sand.u32 %s210, 1
        %s478 = smul.addr %s477, 8
        %s479 = scalar_lea.vmem [#allocation8], %s478
        // Predicated region
        $region53: #{tpu_custom_call.1} parent=39 // pred_check
          %p480 = pneg %p220
        $region54: #{tpu_custom_call.1} parent=39 // pred_check_branch
          %482 = sbr.rel (%p480) target = $region56
        $region55: #{tpu_custom_call.1} parent=39 // pred_region
          %s484 = ssub.s32 128, 128
          %485 = vsyncadd %s476, %s484
          %s486 = sadd.s32 %s32, %s31
          %s487 = sadd.s32 %s486, %s30
          %s488 = smul.addr %s487, 128
          %s489 = scalar_lea.hbm %s5, %s488
          %s491 = sshll.u32 %s479, 4
          %s492 = int_to_ptr.vmem [resolvable:$true] %s491
          %494 = dma.vmem_to_hbm [thread:$0]  %s492, 128, %s489, %s476
        $region56: #{tpu_custom_call.1} parent=39 // pred_fallthru
          _
      $region40: #{tpu_custom_call.1} parent=5 // pred_fallthru
        _
      %p495 = scmp.le.s32.totalorder 2, %s20
      // Predicated region
      $region57: #{tpu_custom_call.1} parent=5 // pred_check
        %p496 = pneg %p495
      $region58: #{tpu_custom_call.1} parent=5 // pred_check_branch
        %498 = sbr.rel (%p496) target = $region60
      $region59: #{tpu_custom_call.1} parent=5 // pred_region
        %s499 = ssub.s32 %s20, 2
        // Predicated region
        $region61: #{tpu_custom_call.1} parent=59 // pred_check
          %p500 = pneg %p226
        $region62: #{tpu_custom_call.1} parent=59 // pred_check_branch
          %502 = sbr.rel (%p500) target = $region64
        $region63: #{tpu_custom_call.1} parent=59 // pred_region
          %s503 = sand.u32 %s211, 1
          %s504 = scalar_lea.sflag [#allocation4], %s503
          %s505 = sand.u32 %s211, 1
          %s506 = smul.addr %s505, 8
          %s507 = scalar_lea.vmem [#allocation8], %s506
          %508 = dma.done %s504, 128
        $region64: #{tpu_custom_call.1} parent=59 // pred_fallthru
          _
      $region60: #{tpu_custom_call.1} parent=5 // pred_fallthru
        _
    $region6: #{tpu_custom_call.1} parent=1 // loop_footer
      %s24 = sadd.s32 1, %s20
    $region7: #{tpu_custom_call.1} parent=1 // loop_footer_branch
      %19 = sbr.rel target = $region3
    $region8: #{tpu_custom_call.1} parent=1 // loop_exit
      _
    %509 = vsyncpa [#allocation3], 1
    %s510 = scalar_lea.sflag [#allocation3], 1
    %511 = vsyncpa %s510, 1
    %512 = vsyncpa [#allocation6], 1
    %s513 = scalar_lea.sflag [#allocation6], 1
    %514 = vsyncpa %s513, 1
    %515 = vsyncpa [#allocation4], 1
    %s516 = scalar_lea.sflag [#allocation4], 1
    %517 = vsyncpa %s516, 1

</llo_original>
